<compile_context>
chip_gen: v6e
topology: v6e:2x2x1
jax: 0.10.0
libtpu: 0.0.40
codegen_flags: <defaults>
</compile_context>

<pallas_src>
import functools

import jax
import jax.numpy as jnp
import numpy as np
from jax.experimental import pallas as pl
from jax.experimental.pallas import tpu as pltpu

_EPS = 1e-6
_VMEM_LIMIT = 48 * 1024 * 1024      # explicit cap; fits v7x (64 MiB) & v5e/v6e
_TILE_BUDGET = 24 * 1024 * 1024     # per-grid-step footprint target
_MAX_TILE_T = 16                    # bounds the unrolled per-frame tap loop


# ---------------------------------------------------------------------------
# Footprint-aware tiling helper (budgets the REAL per-step bytes: padded
# scratch + double-buffered input/residual/output tiles + weights + live acc).
# ---------------------------------------------------------------------------
def _conv_step_bytes(TT, H, W, C, Cout, act_itemsize, mxu_itemsize):
    Hp, Wp = H + 2, W + 2
    pad_scratch = (TT + 2) * Hp * Wp * C * mxu_itemsize      # padded tile
    x_tiles = 2 * (TT + 2) * H * W * C * act_itemsize        # main + halo, 2x buf
    res_tile = 2 * TT * H * W * Cout * 4                     # residual (worst f32)
    out_tile = 2 * TT * H * W * Cout * 4                     # output, 2x buf
    weights = 2 * 27 * C * Cout * mxu_itemsize                # 2x buffered weights
    live_acc = 2 * H * W * Cout * 4                           # per-frame live f32
    return pad_scratch + x_tiles + res_tile + out_tile + weights + live_acc


def _choose_tile_t(T, H, W, C, act_itemsize, mxu_dtype, budget=_TILE_BUDGET):
    mxu_itemsize = jnp.dtype(mxu_dtype).itemsize
    best = 1
    for d in range(1, T + 1):
        if T % d or d > _MAX_TILE_T:
            continue
        if _conv_step_bytes(d, H, W, C, C, act_itemsize, mxu_itemsize) <= budget:
            best = d
    return best


# ---------------------------------------------------------------------------
# Kernel A: per-(batch, t-tile) PARTIAL sum / sum-of-squares for GroupNorm1.
# Fully parallel grid; partials are reduced in tiny JAX glue.
# ---------------------------------------------------------------------------
def _gn_stats_kernel(x_ref, sum_ref, sq_ref):
    C = x_ref.shape[-1]
    xf = x_ref[...].astype(jnp.float32)                 # (1, TT, H, W, C)
    ps = jnp.sum(xf, axis=(0, 1, 2, 3))                 # keep C on lanes
    pq = jnp.sum(xf * xf, axis=(0, 1, 2, 3))
    sum_ref[...] = ps.reshape(1, 1, 1, C)
    sq_ref[...] = pq.reshape(1, 1, 1, C)


def gn_stats(x, tile_t):
    B, T, H, W, C = x.shape
    assert T % tile_t == 0
    nT = T // tile_t
    return pl.pallas_call(
        _gn_stats_kernel,
        out_shape=(jax.ShapeDtypeStruct((B, nT, 1, C), jnp.float32),
                   jax.ShapeDtypeStruct((B, nT, 1, C), jnp.float32)),
        grid=(B, nT),
        in_specs=[pl.BlockSpec((1, tile_t, H, W, C),
                               lambda b, t: (b, t, 0, 0, 0))],
        out_specs=(pl.BlockSpec((1, 1, 1, C), lambda b, t: (b, t, 0, 0)),
                   pl.BlockSpec((1, 1, 1, C), lambda b, t: (b, t, 0, 0))),
        compiler_params=pltpu.CompilerParams(
            dimension_semantics=("parallel", "parallel"),
            vmem_limit_bytes=_VMEM_LIMIT),
    )(x)


# Tiny glue (B x nT x C sized) turning partial sums into per-channel GN
# scale/shift.  NOTE: variance via E[x^2]-E[x]^2 in f32 (guarded at 0); fine
# for zero-ish-mean activations, revisit if inputs carry a large DC offset.
def _gn_scale_shift(psum, psq, count, gamma, beta, num_groups, eps=_EPS):
    B, C = psum.shape[0], psum.shape[-1]
    G = num_groups
    Cg = C // G
    n = float(count * Cg)
    s = jnp.sum(psum, axis=(1, 2)).reshape(B, G, Cg)
    q = jnp.sum(psq, axis=(1, 2)).reshape(B, G, Cg)
    mean = jnp.sum(s, axis=-1) / n                        # (B, G)
    var = jnp.maximum(jnp.sum(q, axis=-1) / n - mean * mean, 0.0)
    inv = jax.lax.rsqrt(var + eps)                        # (B, G)
    scale = gamma.reshape(1, G, Cg) * inv[..., None]      # (B, G, Cg)
    shift = beta.reshape(1, G, Cg) - mean[..., None] * scale
    return scale.reshape(B, 1, C), shift.reshape(B, 1, C)


# ---------------------------------------------------------------------------
# Kernel B/C: fused GroupNorm-apply + SiLU + SamePadConv3d(k=3, s=1, replicate
# pad) [+ residual add] [+ partial stats of the conv output for the next GN].
# ---------------------------------------------------------------------------
def _fused_conv_kernel(xp_ref, xm_ref, xn_ref, scale_ref, shift_ref, w_ref,
                       b_ref, *rest, TT, H, W, C, Cout, has_residual,
                       emit_stats, mxu_dtype):
    idx = 0
    res_ref = None
    if has_residual:
        res_ref = rest[idx]; idx += 1
    o_ref = rest[idx]; idx += 1
    osum_ref = osq_ref = None
    if emit_stats:
        osum_ref, osq_ref = rest[idx], rest[idx + 1]; idx += 2
    pad_ref = rest[idx]

    scale4 = scale_ref[...].astype(jnp.float32).reshape(1, 1, 1, C)
    shift4 = shift_ref[...].astype(jnp.float32).reshape(1, 1, 1, C)

    def norm_silu(v):                       # GN apply + SiLU, f32 math
        vf = v.astype(jnp.float32) * scale4 + shift4
        return (vf * jax.nn.sigmoid(vf)).astype(mxu_dtype)

    # Replicate-padded, normalized tile: built ONCE in a single VMEM scratch
    # and read 27x by the tap matmuls.  The T halo frames came from clamped
    # BlockSpec index maps (the clamp IS the replicate pad at the volume
    # boundary); the H/W halo is replicated here with small edge copies.
    pad_ref[1:TT + 1, 1:H + 1, 1:W + 1, :] = norm_silu(xm_ref[0])
    pad_ref[0:1, 1:H + 1, 1:W + 1, :] = norm_silu(xp_ref[0])
    pad_ref[TT + 1:TT + 2, 1:H + 1, 1:W + 1, :] = norm_silu(xn_ref[0])
    pad_ref[:, 0:1, 1:W + 1, :] = pad_ref[:, 1:2, 1:W + 1, :]
    pad_ref[:, H + 1:H + 2, 1:W + 1, :] = pad_ref[:, H:H + 1, 1:W + 1, :]
    pad_ref[:, :, 0:1, :] = pad_ref[:, :, 1:2, :]
    pad_ref[:, :, W + 1:W + 2, :] = pad_ref[:, :, W:W + 1, :]

    bias = b_ref[...].astype(jnp.float32)               # (1, Cout)

    if emit_stats:
        s_acc = jnp.zeros((1, Cout), jnp.float32)
        q_acc = jnp.zeros((1, Cout), jnp.float32)

    # 27-tap conv, one output frame at a time.  Every tap is an exactly
    # in-bounds rectangular slice of the padded tile; the taps accumulate into
    # a LIVE per-frame f32 value (no VMEM accumulator RMW), bias is folded
    # into the init, and the epilogue is chunked per frame.
    for t in range(TT):
        acc = bias                                       # broadcasts on first add
        for dt in range(3):
            for dh in range(3):
                for dw in range(3):
                    tap = dt * 9 + dh * 3 + dw
                    lhs = pad_ref[t + dt, dh:dh + H, dw:dw + W, :].reshape(H * W, C)
                    acc = acc + jnp.dot(lhs, w_ref[tap],
                                        preferred_element_type=jnp.float32)
        if emit_stats:        # GN2 stats of the conv output (f32, pre-residual)
            s_acc = s_acc + jnp.sum(acc, axis=0, keepdims=True)
            q_acc = q_acc + jnp.sum(acc * acc, axis=0, keepdims=True)
        frame = acc.reshape(H, W, Cout)
        if has_residual:
            frame = frame + res_ref[0, t, :, :, :].astype(jnp.float32)
        o_ref[0, t, :, :, :] = frame.astype(o_ref.dtype)

    if emit_stats:            # per-(b, t-tile) partials -> fully parallel grid
        osum_ref[...] = s_acc.reshape(1, 1, 1, Cout)
        osq_ref[...] = q_acc.reshape(1, 1, 1, Cout)


def fused_gn_silu_conv(x, scale, shift, w_taps, bias, tile_t, *, residual=None,
                       emit_stats=False, mxu_dtype=jnp.bfloat16, out_dtype=None):
    """x: (B,T,H,W,C); scale/shift: (B,1,C); w_taps: (27,C,Cout); bias: (Cout,)."""
    B, T, H, W, C = x.shape
    Cout = w_taps.shape[-1]
    TT = tile_t
    assert T % TT == 0
    nT = T // TT
    out_dtype = x.dtype if out_dtype is None else out_dtype

    in_specs = [
        # previous frame (clamped => replicate pad at the volume edge)
        pl.BlockSpec((1, 1, H, W, C),
                     lambda b, t: (b, jnp.maximum(t * TT - 1, 0), 0, 0, 0)),
        # main T tile
        pl.BlockSpec((1, TT, H, W, C), lambda b, t: (b, t, 0, 0, 0)),
        # next frame (clamped => replicate pad at the volume edge)
        pl.BlockSpec((1, 1, H, W, C),
                     lambda b, t: (b, jnp.minimum(t * TT + TT, T - 1), 0, 0, 0)),
        pl.BlockSpec((1, 1, C), lambda b, t: (b, 0, 0)),        # GN scale
        pl.BlockSpec((1, 1, C), lambda b, t: (b, 0, 0)),        # GN shift
        pl.BlockSpec((27, C, Cout), lambda b, t: (0, 0, 0)),    # weights
        pl.BlockSpec((1, Cout), lambda b, t: (0, 0)),           # bias
    ]
    args = [x, x, x, scale.astype(jnp.float32), shift.astype(jnp.float32),
            w_taps, bias.reshape(1, Cout)]
    if residual is not None:
        in_specs.append(pl.BlockSpec((1, TT, H, W, Cout),
                                     lambda b, t: (b, t, 0, 0, 0)))
        args.append(residual)

    o_shape = jax.ShapeDtypeStruct((B, T, H, W, Cout), out_dtype)
    o_spec = pl.BlockSpec((1, TT, H, W, Cout), lambda b, t: (b, t, 0, 0, 0))
    if emit_stats:
        s_shape = jax.ShapeDtypeStruct((B, nT, 1, Cout), jnp.float32)
        s_spec = pl.BlockSpec((1, 1, 1, Cout), lambda b, t: (b, t, 0, 0))
        out_shape = (o_shape, s_shape, s_shape)
        out_specs = (o_spec, s_spec, s_spec)
    else:
        out_shape = o_shape
        out_specs = o_spec

    kernel = functools.partial(
        _fused_conv_kernel, TT=TT, H=H, W=W, C=C, Cout=Cout,
        has_residual=residual is not None, emit_stats=emit_stats,
        mxu_dtype=mxu_dtype)

    return pl.pallas_call(
        kernel,
        out_shape=out_shape,
        grid=(B, nT),
        in_specs=in_specs,
        out_specs=out_specs,
        scratch_shapes=[
            # single padded-tile scratch (no duplicate flattened LHS copy)
            pltpu.VMEM((TT + 2, H + 2, W + 2, C), mxu_dtype),
        ],
        compiler_params=pltpu.CompilerParams(
            dimension_semantics=("parallel", "parallel"),
            vmem_limit_bytes=_VMEM_LIMIT),
    )(*args)


# ---------------------------------------------------------------------------
# ResBlock forward (out_channels == in_channels => no conv_shortcut)
# ---------------------------------------------------------------------------
def resblock_forward(x_ncdhw, params, num_groups, mxu_dtype=jnp.bfloat16):
    x = jnp.transpose(x_ncdhw, (0, 2, 3, 4, 1))         # NCDHW -> NDHWC
    B, T, H, W, C = x.shape
    count = T * H * W
    tile_t = _choose_tile_t(T, H, W, C, x.dtype.itemsize, mxu_dtype)

    w1 = params["w1"].reshape(27, C, C).astype(mxu_dtype)
    w2 = params["w2"].reshape(27, C, C).astype(mxu_dtype)

    # GroupNorm1 statistics (one tiled pass over x, fully parallel partials).
    s1, q1 = gn_stats(x, tile_t)
    sc1, sh1 = _gn_scale_shift(s1, q1, count, params["gn1_gamma"],
                               params["gn1_beta"], num_groups)

    # norm1-apply + SiLU + conv1 (also emits GroupNorm2 partial statistics).
    # h1 is stored in the MXU dtype (bf16 in production) since conv2 re-casts
    # it anyway; GN2 stats are taken from the f32 conv output inside the kernel.
    h1, s2, q2 = fused_gn_silu_conv(x, sc1, sh1, w1, params["b1"], tile_t,
                                    emit_stats=True, mxu_dtype=mxu_dtype,
                                    out_dtype=mxu_dtype)
    sc2, sh2 = _gn_scale_shift(s2, q2, count, params["gn2_gamma"],
                               params["gn2_beta"], num_groups)

    # norm2-apply + SiLU + conv2 + residual add (dropout p=0 => identity).
    out = fused_gn_silu_conv(h1, sc2, sh2, w2, params["b2"], tile_t,
                             residual=x, emit_stats=False, mxu_dtype=mxu_dtype,
                             out_dtype=x.dtype)
    return jnp.transpose(out, (0, 4, 1, 2, 3))          # back to NCDHW


def init_resblock_params(key, channels):
    k1, k2, k3, k4 = jax.random.split(key, 4)
    std = 1.0 / np.sqrt(channels * 27)
    return dict(
        gn1_gamma=jnp.ones((channels,), jnp.float32),
        gn1_beta=jnp.zeros((channels,), jnp.float32),
        gn2_gamma=jnp.ones((channels,), jnp.float32),
        gn2_beta=jnp.zeros((channels,), jnp.float32),
        w1=jax.random.normal(k1, (3, 3, 3, channels, channels), jnp.float32) * std,
        b1=jax.random.normal(k2, (channels,), jnp.float32) * std,
        w2=jax.random.normal(k3, (3, 3, 3, channels, channels), jnp.float32) * std,
        b2=jax.random.normal(k4, (channels,), jnp.float32) * std,
    )


# ---------------------------------------------------------------------------
# Pure-JAX reference (PyTorch semantics) for the correctness check
# ---------------------------------------------------------------------------
def _ref_groupnorm(x_cl, gamma, beta, G, eps=_EPS):
    B, T, H, W, C = x_cl.shape
    xg = x_cl.reshape(B, T * H * W, G, C // G).astype(jnp.float32)
    mean = xg.mean(axis=(1, 3), keepdims=True)
    var = ((xg - mean) ** 2).mean(axis=(1, 3), keepdims=True)
    xn = ((xg - mean) * jax.lax.rsqrt(var + eps)).reshape(B, T, H, W, C)
    return xn * gamma.reshape(1, 1, 1, 1, C) + beta.reshape(1, 1, 1, 1, C)


def _ref_conv(x_cl, w, b):
    xp = jnp.pad(x_cl, ((0, 0), (1, 1), (1, 1), (1, 1), (0, 0)), mode="edge")
    y = jax.lax.conv_general_dilated(
        xp, w, window_strides=(1, 1, 1), padding="VALID",
        dimension_numbers=("NDHWC", "DHWIO", "NDHWC"))
    return y + b.reshape(1, 1, 1, 1, -1)


def resblock_reference(x_ncdhw, params, num_groups):
    x_cl = jnp.transpose(x_ncdhw, (0, 2, 3, 4, 1))
    h = _ref_groupnorm(x_cl, params["gn1_gamma"], params["gn1_beta"], num_groups)
    h = h * jax.nn.sigmoid(h)
    h = _ref_conv(h, params["w1"], params["b1"])
    h = _ref_groupnorm(h, params["gn2_gamma"], params["gn2_beta"], num_groups)
    h = h * jax.nn.sigmoid(h)
    h = _ref_conv(h, params["w2"], params["b2"])
    out_cl = x_cl + h
    return jnp.transpose(out_cl, (0, 4, 1, 2, 3))


if __name__ == "__main__":
    key = jax.random.PRNGKey(0)
    kx, kp = jax.random.split(key)

    B, C, D, H, W = 2, 8, 4, 8, 8   # NCDHW, small shapes
    num_groups = 4                  # Normalize(..., num_groups=4) so C % G == 0

    x = jax.random.normal(kx, (B, C, D, H, W), jnp.float32)
    params = init_resblock_params(kp, C)

    ref = jax.block_until_ready(resblock_reference(x, params, num_groups))

    # f32 MXU operands / f32 intermediate: check against the f32 reference.
    out_f32 = jax.block_until_ready(
        resblock_forward(x, params, num_groups, mxu_dtype=jnp.float32))
    assert out_f32.shape == x.shape
    np.testing.assert_allclose(np.asarray(out_f32), np.asarray(ref),
                               rtol=2e-2, atol=2e-2)

    # Production path: bf16 MXU operands + bf16 h1 (f32 accumulation / GN math).
    out_bf16 = jax.block_until_ready(
        resblock_forward(x, params, num_groups, mxu_dtype=jnp.bfloat16))
    np.testing.assert_allclose(np.asarray(out_bf16), np.asarray(ref),
                               rtol=6e-2, atol=6e-2)

    print("KERNEL_OK")
</pallas_src>

<mosaic_0001>
module attributes {stable_mosaic.version = 11 : i64} {
  func.func @_gn_stats_kernel(%arg0: i32, %arg1: i32, %arg2: memref<1x4x8x8x8xf32, #tpu.memory_space<vmem>>, %arg3: memref<1x1x1x8xf32, #tpu.memory_space<vmem>>, %arg4: memref<1x1x1x8xf32, #tpu.memory_space<vmem>>) attributes {dimension_semantics = [#tpu.dimension_semantics<parallel>, #tpu.dimension_semantics<parallel>], iteration_bounds = array<i64: 2, 1>, scalar_prefetch = 0 : i64, scratch_operands = 0 : i64, tpu.core_type = #tpu.core_type<tc>, window_params = [{transform_indices = @transform_0, window_bounds = array<i64: 1, 4, 8, 8, 8>}, {transform_indices = @transform_1, window_bounds = array<i64: 1, 1, 1, 8>}, {transform_indices = @transform_2, window_bounds = array<i64: 1, 1, 1, 8>}]} {
    %c0 = arith.constant 0 : index
    %c0_0 = arith.constant 0 : index
    %c0_1 = arith.constant 0 : index
    %c0_2 = arith.constant 0 : index
    %c0_3 = arith.constant 0 : index
    %0 = vector.load %arg2[%c0, %c0_0, %c0_1, %c0_2, %c0_3] : memref<1x4x8x8x8xf32, #tpu.memory_space<vmem>>, vector<1x4x8x8x8xf32>
    %cst = arith.constant dense<0.000000e+00> : vector<8xf32>
    %1 = vector.multi_reduction <add>, %0, %cst [0, 1, 2, 3] : vector<1x4x8x8x8xf32> to vector<8xf32>
    %2 = arith.mulf %0, %0 : vector<1x4x8x8x8xf32>
    %cst_4 = arith.constant dense<0.000000e+00> : vector<8xf32>
    %3 = vector.multi_reduction <add>, %2, %cst_4 [0, 1, 2, 3] : vector<1x4x8x8x8xf32> to vector<8xf32>
    %4 = vector.shape_cast %1 : vector<8xf32> to vector<1x1x1x8xf32>
    %c0_5 = arith.constant 0 : index
    %c0_6 = arith.constant 0 : index
    %c0_7 = arith.constant 0 : index
    %c0_8 = arith.constant 0 : index
    %5 = vector.load %arg3[%c0_5, %c0_6, %c0_7, %c0_8] : memref<1x1x1x8xf32, #tpu.memory_space<vmem>>, vector<1x1x1x8xf32>
    tpu.vector_store %arg3[%c0_5, %c0_6, %c0_7, %c0_8], %4 {strides = array<i32>} : memref<1x1x1x8xf32, #tpu.memory_space<vmem>>, vector<1x1x1x8xf32>,
    %6 = vector.shape_cast %3 : vector<8xf32> to vector<1x1x1x8xf32>
    %c0_9 = arith.constant 0 : index
    %c0_10 = arith.constant 0 : index
    %c0_11 = arith.constant 0 : index
    %c0_12 = arith.constant 0 : index
    %7 = vector.load %arg4[%c0_9, %c0_10, %c0_11, %c0_12] : memref<1x1x1x8xf32, #tpu.memory_space<vmem>>, vector<1x1x1x8xf32>
    tpu.vector_store %arg4[%c0_9, %c0_10, %c0_11, %c0_12], %6 {strides = array<i32>} : memref<1x1x1x8xf32, #tpu.memory_space<vmem>>, vector<1x1x1x8xf32>,
    return
  }
  func.func @transform_0(%arg0: i32, %arg1: i32) -> (i32, i32, i32, i32, i32) {
    %c0_i32 = arith.constant 0 : i32
    %c0_i32_0 = arith.constant 0 : i32
    %c0_i32_1 = arith.constant 0 : i32
    %c0_i32_2 = arith.constant 0 : i32
    return %arg0, %arg1, %c0_i32, %c0_i32_0, %c0_i32_1 : i32, i32, i32, i32, i32
  }
  func.func @transform_1(%arg0: i32, %arg1: i32) -> (i32, i32, i32, i32) {
    %c0_i32 = arith.constant 0 : i32
    %c0_i32_0 = arith.constant 0 : i32
    %c0_i32_1 = arith.constant 0 : i32
    return %arg0, %arg1, %c0_i32, %c0_i32_0 : i32, i32, i32, i32
  }
  func.func @transform_2(%arg0: i32, %arg1: i32) -> (i32, i32, i32, i32) {
    %c0_i32 = arith.constant 0 : i32
    %c0_i32_0 = arith.constant 0 : i32
    %c0_i32_1 = arith.constant 0 : i32
    return %arg0, %arg1, %c0_i32, %c0_i32_0 : i32, i32, i32, i32
  }
}

</mosaic_0001>

<llo_original>
// kernel: tpu_custom_call.1
$region0: #{tpu_custom_call.1}
  #allocation0 [shape = 'u32[]', space=smem, size = 0x4, offset = 0x4, fixed_abs, tag = 'smem constant byte address 0x4 - core index']
  #allocation1 [shape = 'u32[144,128]{1,0:T(1,128)}', space=vmem, size = 0x12000, scoped, tag = 'internal scratch']
  %s0 = inlined_call_operand.hbm [shape: f32[2,4,8,8,8], index: 0, kind: input, shape index: {}]
  %s1 = inlined_call_operand.hbm [shape: f32[2,1,1,8], index: 1, kind: output, shape index: {0}]
  %s2 = inlined_call_operand.hbm [shape: f32[2,1,1,8], index: 2, kind: output, shape index: {1}]
  %3 = xla_tuple %s1, %s2
  %s4 = sld [smem:[#allocation0]]
  $region49: #{tpu_custom_call.1} parent=0
    _
  %s6 = ssub.s32 1, %s4
  %s7 = scalar_select 0, %s6, %s4
  $region1: #{tpu_custom_call.1} parent=0
    #allocation2 [shape = 'u8[262144]{0}', space=vmem, size = 0x40000, scoped, tag = 'input window, operand 0']
    #allocation3 [shape = 's32[2]{0}', space=sflag, size = 0x8, scoped, tag = 'scoped memory for tpu_custom_call.1']
    #allocation4 [shape = 's32[2]{0}', space=sflag, size = 0x8, scoped, tag = 'scoped memory for tpu_custom_call.1']
    #allocation5 [shape = 'u8[1024]{0}', space=vmem, size = 0x400, scoped, tag = 'output window, operand 0']
    #allocation6 [shape = 'u8[1024]{0}', space=vmem, size = 0x400, scoped, tag = 'output window, operand 1']
    #allocation7 [shape = 's32[2]{0}', space=sflag, size = 0x8, scoped, tag = 'scoped memory for tpu_custom_call.1']
    %8 = vsyncpa [#allocation3], 0
    %s9 = scalar_lea.sflag [#allocation3], 1
    %10 = vsyncpa %s9, 0
    %11 = vsyncpa [#allocation4], 0
    %s12 = scalar_lea.sflag [#allocation4], 1
    %13 = vsyncpa %s12, 0
    %14 = vsyncpa [#allocation7], 0
    %s15 = scalar_lea.sflag [#allocation7], 1
    %16 = vsyncpa %s15, 0
    loop: start=0, step=1, limit=4
    $region2: #{tpu_custom_call.1} parent=1 // loop_pre_header
      _
    $region3: #{tpu_custom_call.1} parent=1 // loop_header
      %s18 = sphi 0, %s22
      %p19 = scmp.ge.s32.totalorder %s18, 4
      %s25 = sphi 0, %s37
      %s26 = sphi 0, %s33
      %s27 = sphi 0, %s25
      %s28 = sphi 0, %s26
      %s29 = sphi 0, %s27
      %s30 = sphi 0, %s28
      %s42 = sphi 0, %s44
      %s45 = sphi 0, %s42
      %s46 = sphi 0, %s45
      %s62 = sphi 0, %s46
      %s70 = sphi 0, %s72
      %s73 = sphi 0, %s70
      %s74 = sphi 0, %s73
      %s90 = sphi 0, %s74
      %s98 = sphi 0, %s100
      %s101 = sphi 0, %s98
      %s102 = sphi 0, %s101
      %s118 = sphi 0, %s102
    $region4: #{tpu_custom_call.1} parent=1 // loop_header_branch
      %21 = sbr.rel (%p19) target = $region8
    $region5: #{tpu_custom_call.1} parent=1 // loop_body
      %s23 = ssub.s32 %s18, 1
      %s24 = ssub.s32 %s18, 2
      %s31 = sadd.s32 1, %s26
      %p32 = scmp.ge.s32.totalorder %s31, 1
      %s33 = scalar_select %p32, 0, %s31
      %s34 = sadd.s32 1, %s25
      %s35 = scalar_select %p32, %s34, %s25
      %p36 = scmp.ge.s32.totalorder %s35, 2
      %s37 = scalar_select %p36, 0, %s35
      %s38 = ssub.s32 %s25, %s37
      %s39 = ssub.s32 %s26, %s33
      %s40 = sor.u32 %s38, %s39
      %p41 = scmp.eq.s32.totalorder %s40, 0
      %s43 = sadd.s32 %s42, 1
      %s44 = scalar_select %p41, %s42, %s43
      %p47 = pneg %p41
      %p48 = scmp.eq.s32.totalorder %s18, 1
      %p49 = por %p47, %p48
      %p50 = scmp.ne.s32.totalorder %s42, %s45
      %p51 = scmp.eq.s32.totalorder %s18, 0
      %p52 = por %p50, %p51
      %p53 = scmp.ne.s32.totalorder %s42, %s45
      %p54 = scmp.eq.s32.totalorder %s23, 1
      %p55 = por %p53, %p54
      %p56 = scmp.ne.s32.totalorder %s45, %s46
      %p57 = scmp.eq.s32.totalorder %s23, 0
      %p58 = por %p56, %p57
      %p59 = scmp.ne.s32.totalorder %s45, %s46
      %p60 = scmp.eq.s32.totalorder %s24, 1
      %p61 = por %p59, %p60
      %p63 = scmp.ne.s32.totalorder %s46, %s62
      %p64 = scmp.eq.s32.totalorder %s24, 0
      %p65 = por %p63, %p64
      %s66 = ssub.s32 %s25, %s37
      %s67 = ssub.s32 %s26, %s33
      %s68 = sor.u32 %s66, %s67
      %p69 = scmp.eq.s32.totalorder %s68, 0
      %s71 = sadd.s32 %s70, 1
      %s72 = scalar_select %p69, %s70, %s71
      %p75 = pneg %p69
      %p76 = scmp.eq.s32.totalorder %s18, 1
      %p77 = por %p75, %p76
      %p78 = scmp.ne.s32.totalorder %s70, %s73
      %p79 = scmp.eq.s32.totalorder %s18, 0
      %p80 = por %p78, %p79
      %p81 = scmp.ne.s32.totalorder %s70, %s73
      %p82 = scmp.eq.s32.totalorder %s23, 1
      %p83 = por %p81, %p82
      %p84 = scmp.ne.s32.totalorder %s73, %s74
      %p85 = scmp.eq.s32.totalorder %s23, 0
      %p86 = por %p84, %p85
      %p87 = scmp.ne.s32.totalorder %s73, %s74
      %p88 = scmp.eq.s32.totalorder %s24, 1
      %p89 = por %p87, %p88
      %p91 = scmp.ne.s32.totalorder %s74, %s90
      %p92 = scmp.eq.s32.totalorder %s24, 0
      %p93 = por %p91, %p92
      %s94 = ssub.s32 %s25, %s37
      %s95 = ssub.s32 %s26, %s33
      %s96 = sor.u32 %s94, %s95
      %p97 = scmp.eq.s32.totalorder %s96, 0
      %s99 = sadd.s32 %s98, 1
      %s100 = scalar_select %p97, %s98, %s99
      %p103 = pneg %p97
      %p104 = scmp.eq.s32.totalorder %s18, 1
      %p105 = por %p103, %p104
      %p106 = scmp.ne.s32.totalorder %s98, %s101
      %p107 = scmp.eq.s32.totalorder %s18, 0
      %p108 = por %p106, %p107
      %p109 = scmp.ne.s32.totalorder %s98, %s101
      %p110 = scmp.eq.s32.totalorder %s23, 1
      %p111 = por %p109, %p110
      %p112 = scmp.ne.s32.totalorder %s101, %s102
      %p113 = scmp.eq.s32.totalorder %s23, 0
      %p114 = por %p112, %p113
      %p115 = scmp.ne.s32.totalorder %s101, %s102
      %p116 = scmp.eq.s32.totalorder %s24, 1
      %p117 = por %p115, %p116
      %p119 = scmp.ne.s32.totalorder %s102, %s118
      %p120 = scmp.eq.s32.totalorder %s24, 0
      %p121 = por %p119, %p120
      %p122 = scmp.le.s32.totalorder 1, %s18
      %p123 = scmp.lt.s32.totalorder %s18, 3
      %p124 = pnand %p122, %p123
      %p125 = pneg %p124
      // Predicated region
      $region9: #{tpu_custom_call.1} parent=5 // pred_check
        _
      $region10: #{tpu_custom_call.1} parent=5 // pred_check_branch
        %127 = sbr.rel (%p124) target = $region12
      $region11: #{tpu_custom_call.1} parent=5 // pred_region
        %s128 = ssub.s32 %s18, 1
      $region12: #{tpu_custom_call.1} parent=5 // pred_fallthru
        _
      %p129 = scmp.lt.s32.totalorder %s18, 2
      // Predicated region
      $region13: #{tpu_custom_call.1} parent=5 // pred_check
        %p130 = pneg %p129
      $region14: #{tpu_custom_call.1} parent=5 // pred_check_branch
        %132 = sbr.rel (%p130) target = $region16
      $region15: #{tpu_custom_call.1} parent=5 // pred_region
        // Predicated region
        $region17: #{tpu_custom_call.1} parent=15 // pred_check
          %p133 = pneg %p52
        $region18: #{tpu_custom_call.1} parent=15 // pred_check_branch
          %135 = sbr.rel (%p133) target = $region20
        $region19: #{tpu_custom_call.1} parent=15 // pred_region
          %s136 = sand.u32 %s42, 1
          %s137 = scalar_lea.sflag [#allocation3], %s136
          %s138 = sand.u32 %s42, 1
          %s139 = smul.addr %s138, 256
          %s140 = scalar_lea.vmem [#allocation2], %s139
          %s141 = smul.u32 4, %s26
          %s143 = ssub.s32 4096, 4096
          %144 = vsyncadd %s137, %s143
          %s145 = smul.addr %s141, 8
          %s146 = smul.addr %s25, 32
          %s147 = sadd.s32 %s145, %s146
          %s148 = smul.addr %s147, 128
          %s149 = scalar_lea.hbm %s0, %s148
          %s150 = sshll.u32 %s140, 4
          %s151 = int_to_ptr.vmem [resolvable:$true] %s150
          %156 = dma.hbm_to_vmem [thread:$0]  %s149, 4096, %s151, %s137, 128, 128, 8
        $region20: #{tpu_custom_call.1} parent=15 // pred_fallthru
          _
      $region16: #{tpu_custom_call.1} parent=5 // pred_fallthru
        _
      %p157 = scmp.le.s32.totalorder 1, %s18
      %p158 = scmp.lt.s32.totalorder %s18, 3
      %p159 = pnand %p157, %p158
      %p160 = pneg %p159
      // Predicated region
      $region21: #{tpu_custom_call.1} parent=5 // pred_check
        _
      $region22: #{tpu_custom_call.1} parent=5 // pred_check_branch
        %162 = sbr.rel (%p159) target = $region24
      $region23: #{tpu_custom_call.1} parent=5 // pred_region
        %s163 = ssub.s32 %s18, 1
        %s164 = sand.u32 %s45, 1
        %s165 = scalar_lea.sflag [#allocation3], %s164
        %s166 = sand.u32 %s45, 1
        %s167 = smul.addr %s166, 256
        %s168 = scalar_lea.vmem [#allocation2], %s167
        // Predicated region
        $region25: #{tpu_custom_call.1} parent=23 // pred_check
          %p169 = pneg %p58
        $region26: #{tpu_custom_call.1} parent=23 // pred_check_branch
          %171 = sbr.rel (%p169) target = $region28
        $region27: #{tpu_custom_call.1} parent=23 // pred_region
          %172 = dma.done %s165, 4096
        $region28: #{tpu_custom_call.1} parent=23 // pred_fallthru
          _
        %s173 = sand.u32 %s45, 1
        %s174 = scalar_lea.sflag [#allocation3], %s173
        %s175 = sand.u32 %s45, 1
        %s176 = smul.addr %s175, 256
        %s177 = scalar_lea.vmem [#allocation2], %s176
        %p178 = pneg %p58
        %p179 = pneg %p55
        %p180 = pneg %p86
        %p181 = pneg %p83
        %s182 = sand.u32 %s73, 1
        %s183 = scalar_lea.sflag [#allocation4], %s182
        %s184 = sand.u32 %s73, 1
        %s185 = scalar_lea.vmem [#allocation5], %s184
        %p186 = pneg %p114
        %p187 = pneg %p111
        %s188 = sand.u32 %s101, 1
        %s189 = scalar_lea.sflag [#allocation7], %s188
        %s190 = sand.u32 %s101, 1
        %s191 = scalar_lea.vmem [#allocation6], %s190
        %s192 = smul.u32 4, %s28
        %v193 = vld [vmem:[%s168] sm:$0xff]
        %v194 = vld [vmem:[%s168 + $0x8] sm:$0xff]
        %v195 = vld [vmem:[%s168 + $0x10] sm:$0xff]
        %v196 = vld [vmem:[%s168 + $0x18] sm:$0xff]
        %v197 = vld [vmem:[%s168 + $0x20] sm:$0xff]
        %v198 = vld [vmem:[%s168 + $0x28] sm:$0xff]
        %v199 = vld [vmem:[%s168 + $0x30] sm:$0xff]
        %v200 = vld [vmem:[%s168 + $0x38] sm:$0xff]
        %v201 = vld [vmem:[%s168 + $0x40] sm:$0xff]
        %v202 = vld [vmem:[%s168 + $0x48] sm:$0xff]
        %v203 = vld [vmem:[%s168 + $0x50] sm:$0xff]
        %v204 = vld [vmem:[%s168 + $0x58] sm:$0xff]
        %v205 = vld [vmem:[%s168 + $0x60] sm:$0xff]
        %v206 = vld [vmem:[%s168 + $0x68] sm:$0xff]
        %v207 = vld [vmem:[%s168 + $0x70] sm:$0xff]
        %v208 = vld [vmem:[%s168 + $0x78] sm:$0xff]
        %v209 = vld [vmem:[%s168 + $0x80] sm:$0xff]
        %v210 = vld [vmem:[%s168 + $0x88] sm:$0xff]
        %v211 = vld [vmem:[%s168 + $0x90] sm:$0xff]
        %v212 = vld [vmem:[%s168 + $0x98] sm:$0xff]
        %v213 = vld [vmem:[%s168 + $0xa0] sm:$0xff]
        %v214 = vld [vmem:[%s168 + $0xa8] sm:$0xff]
        %v215 = vld [vmem:[%s168 + $0xb0] sm:$0xff]
        %v216 = vld [vmem:[%s168 + $0xb8] sm:$0xff]
        %v217 = vld [vmem:[%s168 + $0xc0] sm:$0xff]
        %v218 = vld [vmem:[%s168 + $0xc8] sm:$0xff]
        %v219 = vld [vmem:[%s168 + $0xd0] sm:$0xff]
        %v220 = vld [vmem:[%s168 + $0xd8] sm:$0xff]
        %v221 = vld [vmem:[%s168 + $0xe0] sm:$0xff]
        %v222 = vld [vmem:[%s168 + $0xe8] sm:$0xff]
        %v223 = vld [vmem:[%s168 + $0xf0] sm:$0xff]
        %v224 = vld [vmem:[%s168 + $0xf8] sm:$0xff]
        %vm225 = vcmask 64512
        %v226 = vsel %vm225, %v193, 0.0
        %v227 = vsel %vm225, %v194, 0.0
        %v228 = vadd.f32 %v226, %v227
        %v229 = vsel %vm225, %v195, 0.0
        %v230 = vadd.f32 %v228, %v229
        %v231 = vsel %vm225, %v196, 0.0
        %v232 = vadd.f32 %v230, %v231
        %v233 = vsel %vm225, %v197, 0.0
        %v234 = vadd.f32 %v232, %v233
        %v235 = vsel %vm225, %v198, 0.0
        %v236 = vadd.f32 %v234, %v235
        %v237 = vsel %vm225, %v199, 0.0
        %v238 = vadd.f32 %v236, %v237
        %v239 = vsel %vm225, %v200, 0.0
        %v240 = vadd.f32 %v238, %v239
        %v241 = vsel %vm225, %v201, 0.0
        %v242 = vadd.f32 %v240, %v241
        %v243 = vsel %vm225, %v202, 0.0
        %v244 = vadd.f32 %v242, %v243
        %v245 = vsel %vm225, %v203, 0.0
        %v246 = vadd.f32 %v244, %v245
        %v247 = vsel %vm225, %v204, 0.0
        %v248 = vadd.f32 %v246, %v247
        %v249 = vsel %vm225, %v205, 0.0
        %v250 = vadd.f32 %v248, %v249
        %v251 = vsel %vm225, %v206, 0.0
        %v252 = vadd.f32 %v250, %v251
        %v253 = vsel %vm225, %v207, 0.0
        %v254 = vadd.f32 %v252, %v253
        %v255 = vsel %vm225, %v208, 0.0
        %v256 = vadd.f32 %v254, %v255
        %v257 = vsel %vm225, %v209, 0.0
        %v258 = vadd.f32 %v256, %v257
        %v259 = vsel %vm225, %v210, 0.0
        %v260 = vadd.f32 %v258, %v259
        %v261 = vsel %vm225, %v211, 0.0
        %v262 = vadd.f32 %v260, %v261
        %v263 = vsel %vm225, %v212, 0.0
        %v264 = vadd.f32 %v262, %v263
        %v265 = vsel %vm225, %v213, 0.0
        %v266 = vadd.f32 %v264, %v265
        %v267 = vsel %vm225, %v214, 0.0
        %v268 = vadd.f32 %v266, %v267
        %v269 = vsel %vm225, %v215, 0.0
        %v270 = vadd.f32 %v268, %v269
        %v271 = vsel %vm225, %v216, 0.0
        %v272 = vadd.f32 %v270, %v271
        %v273 = vsel %vm225, %v217, 0.0
        %v274 = vadd.f32 %v272, %v273
        %v275 = vsel %vm225, %v218, 0.0
        %v276 = vadd.f32 %v274, %v275
        %v277 = vsel %vm225, %v219, 0.0
        %v278 = vadd.f32 %v276, %v277
        %v279 = vsel %vm225, %v220, 0.0
        %v280 = vadd.f32 %v278, %v279
        %v281 = vsel %vm225, %v221, 0.0
        %v282 = vadd.f32 %v280, %v281
        %v283 = vsel %vm225, %v222, 0.0
        %v284 = vadd.f32 %v282, %v283
        %v285 = vsel %vm225, %v223, 0.0
        %v286 = vadd.f32 %v284, %v285
        %v287 = vsel %vm225, %v224, 0.0
        %v288 = vadd.f32 %v286, %v287
        %v289 = vrot.slane %v288, 4
        %v290 = vadd.f32 %v288, %v289
        %v291 = vrot.slane %v290, 2
        %v292 = vadd.f32 %v290, %v291
        %v293 = vrot.slane %v292, 1
        %v294 = vadd.f32 %v292, %v293
        %v295 = vmul.f32 %v193, %v193
        %v296 = vmul.f32 %v194, %v194
        %v297 = vmul.f32 %v195, %v195
        %v298 = vmul.f32 %v196, %v196
        %v299 = vmul.f32 %v197, %v197
        %v300 = vmul.f32 %v198, %v198
        %v301 = vmul.f32 %v199, %v199
        %v302 = vmul.f32 %v200, %v200
        %v303 = vmul.f32 %v201, %v201
        %v304 = vmul.f32 %v202, %v202
        %v305 = vmul.f32 %v203, %v203
        %v306 = vmul.f32 %v204, %v204
        %v307 = vmul.f32 %v205, %v205
        %v308 = vmul.f32 %v206, %v206
        %v309 = vmul.f32 %v207, %v207
        %v310 = vmul.f32 %v208, %v208
        %v311 = vmul.f32 %v209, %v209
        %v312 = vmul.f32 %v210, %v210
        %v313 = vmul.f32 %v211, %v211
        %v314 = vmul.f32 %v212, %v212
        %v315 = vmul.f32 %v213, %v213
        %v316 = vmul.f32 %v214, %v214
        %v317 = vmul.f32 %v215, %v215
        %v318 = vmul.f32 %v216, %v216
        %v319 = vmul.f32 %v217, %v217
        %v320 = vmul.f32 %v218, %v218
        %v321 = vmul.f32 %v219, %v219
        %v322 = vmul.f32 %v220, %v220
        %v323 = vmul.f32 %v221, %v221
        %v324 = vmul.f32 %v222, %v222
        %v325 = vmul.f32 %v223, %v223
        %v326 = vmul.f32 %v224, %v224
        %v327 = vsel %vm225, %v295, 0.0
        %v328 = vsel %vm225, %v296, 0.0
        %v329 = vadd.f32 %v327, %v328
        %v330 = vsel %vm225, %v297, 0.0
        %v331 = vadd.f32 %v329, %v330
        %v332 = vsel %vm225, %v298, 0.0
        %v333 = vadd.f32 %v331, %v332
        %v334 = vsel %vm225, %v299, 0.0
        %v335 = vadd.f32 %v333, %v334
        %v336 = vsel %vm225, %v300, 0.0
        %v337 = vadd.f32 %v335, %v336
        %v338 = vsel %vm225, %v301, 0.0
        %v339 = vadd.f32 %v337, %v338
        %v340 = vsel %vm225, %v302, 0.0
        %v341 = vadd.f32 %v339, %v340
        %v342 = vsel %vm225, %v303, 0.0
        %v343 = vadd.f32 %v341, %v342
        %v344 = vsel %vm225, %v304, 0.0
        %v345 = vadd.f32 %v343, %v344
        %v346 = vsel %vm225, %v305, 0.0
        %v347 = vadd.f32 %v345, %v346
        %v348 = vsel %vm225, %v306, 0.0
        %v349 = vadd.f32 %v347, %v348
        %v350 = vsel %vm225, %v307, 0.0
        %v351 = vadd.f32 %v349, %v350
        %v352 = vsel %vm225, %v308, 0.0
        %v353 = vadd.f32 %v351, %v352
        %v354 = vsel %vm225, %v309, 0.0
        %v355 = vadd.f32 %v353, %v354
        %v356 = vsel %vm225, %v310, 0.0
        %v357 = vadd.f32 %v355, %v356
        %v358 = vsel %vm225, %v311, 0.0
        %v359 = vadd.f32 %v357, %v358
        %v360 = vsel %vm225, %v312, 0.0
        %v361 = vadd.f32 %v359, %v360
        %v362 = vsel %vm225, %v313, 0.0
        %v363 = vadd.f32 %v361, %v362
        %v364 = vsel %vm225, %v314, 0.0
        %v365 = vadd.f32 %v363, %v364
        %v366 = vsel %vm225, %v315, 0.0
        %v367 = vadd.f32 %v365, %v366
        %v368 = vsel %vm225, %v316, 0.0
        %v369 = vadd.f32 %v367, %v368
        %v370 = vsel %vm225, %v317, 0.0
        %v371 = vadd.f32 %v369, %v370
        %v372 = vsel %vm225, %v318, 0.0
        %v373 = vadd.f32 %v371, %v372
        %v374 = vsel %vm225, %v319, 0.0
        %v375 = vadd.f32 %v373, %v374
        %v376 = vsel %vm225, %v320, 0.0
        %v377 = vadd.f32 %v375, %v376
        %v378 = vsel %vm225, %v321, 0.0
        %v379 = vadd.f32 %v377, %v378
        %v380 = vsel %vm225, %v322, 0.0
        %v381 = vadd.f32 %v379, %v380
        %v382 = vsel %vm225, %v323, 0.0
        %v383 = vadd.f32 %v381, %v382
        %v384 = vsel %vm225, %v324, 0.0
        %v385 = vadd.f32 %v383, %v384
        %v386 = vsel %vm225, %v325, 0.0
        %v387 = vadd.f32 %v385, %v386
        %v388 = vsel %vm225, %v326, 0.0
        %v389 = vadd.f32 %v387, %v388
        %v390 = vrot.slane %v389, 4
        %v391 = vadd.f32 %v389, %v390
        %v392 = vrot.slane %v391, 2
        %v393 = vadd.f32 %v391, %v392
        %v394 = vrot.slane %v393, 1
        %v395 = vadd.f32 %v393, %v394
        %vm396 = vcmask 57344
        %397 = vst.msk [vmem:[%s185] sm:$0x1] %vm396, %v294
        %398 = vst.msk [vmem:[%s191] sm:$0x1] %vm396, %v395
        %s399 = sand.u32 %s73, 1
        %s400 = scalar_lea.sflag [#allocation4], %s399
        %s401 = sand.u32 %s73, 1
        %s402 = scalar_lea.vmem [#allocation5], %s401
        %s403 = sand.u32 %s101, 1
        %s404 = scalar_lea.sflag [#allocation7], %s403
        %s405 = sand.u32 %s101, 1
        %s406 = scalar_lea.vmem [#allocation6], %s405
        // Predicated region
        $region29: #{tpu_custom_call.1} parent=23 // pred_check
          %p407 = pneg %p83
        $region30: #{tpu_custom_call.1} parent=23 // pred_check_branch
          %409 = sbr.rel (%p407) target = $region32
        $region31: #{tpu_custom_call.1} parent=23 // pred_region
          %s411 = ssub.s32 16, 16
          %412 = vsyncadd %s400, %s411
          %s413 = sadd.s32 %s28, %s27
          %s414 = smul.addr %s413, 16
          %s415 = scalar_lea.hbm %s1, %s414
          %s417 = sshll.u32 %s402, 4
          %s418 = int_to_ptr.vmem [resolvable:$true] %s417
          %420 = dma.vmem_to_hbm [thread:$0]  %s418, 16, %s415, %s400
        $region32: #{tpu_custom_call.1} parent=23 // pred_fallthru
          _
        // Predicated region
        $region33: #{tpu_custom_call.1} parent=23 // pred_check
          %p421 = pneg %p111
        $region34: #{tpu_custom_call.1} parent=23 // pred_check_branch
          %423 = sbr.rel (%p421) target = $region36
        $region35: #{tpu_custom_call.1} parent=23 // pred_region
          %s425 = ssub.s32 16, 16
          %426 = vsyncadd %s404, %s425
          %s427 = sadd.s32 %s28, %s27
          %s428 = smul.addr %s427, 16
          %s429 = scalar_lea.hbm %s2, %s428
          %s431 = sshll.u32 %s406, 4
          %s432 = int_to_ptr.vmem [resolvable:$true] %s431
          %434 = dma.vmem_to_hbm [thread:$0]  %s432, 16, %s429, %s404
        $region36: #{tpu_custom_call.1} parent=23 // pred_fallthru
          _
      $region24: #{tpu_custom_call.1} parent=5 // pred_fallthru
        _
      %p435 = scmp.le.s32.totalorder 2, %s18
      // Predicated region
      $region37: #{tpu_custom_call.1} parent=5 // pred_check
        %p436 = pneg %p435
      $region38: #{tpu_custom_call.1} parent=5 // pred_check_branch
        %438 = sbr.rel (%p436) target = $region40
      $region39: #{tpu_custom_call.1} parent=5 // pred_region
        %s439 = ssub.s32 %s18, 2
        // Predicated region
        $region41: #{tpu_custom_call.1} parent=39 // pred_check
          %p440 = pneg %p89
        $region42: #{tpu_custom_call.1} parent=39 // pred_check_branch
          %442 = sbr.rel (%p440) target = $region44
        $region43: #{tpu_custom_call.1} parent=39 // pred_region
          %s443 = sand.u32 %s74, 1
          %s444 = scalar_lea.sflag [#allocation4], %s443
          %s445 = sand.u32 %s74, 1
          %s446 = scalar_lea.vmem [#allocation5], %s445
          %447 = dma.done %s444, 16
        $region44: #{tpu_custom_call.1} parent=39 // pred_fallthru
          _
        // Predicated region
        $region45: #{tpu_custom_call.1} parent=39 // pred_check
          %p448 = pneg %p117
        $region46: #{tpu_custom_call.1} parent=39 // pred_check_branch
          %450 = sbr.rel (%p448) target = $region48
        $region47: #{tpu_custom_call.1} parent=39 // pred_region
          %s451 = sand.u32 %s102, 1
          %s452 = scalar_lea.sflag [#allocation7], %s451
          %s453 = sand.u32 %s102, 1
          %s454 = scalar_lea.vmem [#allocation6], %s453
          %455 = dma.done %s452, 16
        $region48: #{tpu_custom_call.1} parent=39 // pred_fallthru
          _
      $region40: #{tpu_custom_call.1} parent=5 // pred_fallthru
        _
    $region6: #{tpu_custom_call.1} parent=1 // loop_footer
      %s22 = sadd.s32 1, %s18
    $region7: #{tpu_custom_call.1} parent=1 // loop_footer_branch
      %17 = sbr.rel target = $region3
    $region8: #{tpu_custom_call.1} parent=1 // loop_exit
      _
    %456 = vsyncpa [#allocation3], 1
    %s457 = scalar_lea.sflag [#allocation3], 1
    %458 = vsyncpa %s457, 1
    %459 = vsyncpa [#allocation4], 1
    %s460 = scalar_lea.sflag [#allocation4], 1
    %461 = vsyncpa %s460, 1
    %462 = vsyncpa [#allocation7], 1
    %s463 = scalar_lea.sflag [#allocation7], 1
    %464 = vsyncpa %s463, 1

</llo_original>
